<compile_context>
chip_gen: v6e
topology: v6e:2x2x1
jax: 0.10.0
libtpu: 0.0.40
codegen_flags: <defaults>
</compile_context>

<pallas_src>
import functools

import jax
import jax.numpy as jnp
from jax.experimental import pallas as pl
from jax.experimental.pallas import tpu as pltpu

D_IN = 28 * 28          # 784
D_IN_PAD = 896          # 7 * 128  (K aligned to MXU lanes)
H1, H2 = 256, 128
D_OUT = 10
D_OUT_PAD = 128         # lane-dense output tile


def mlp_kernel(x_ref, w1_ref, b1_ref, w2_ref, b2_ref, w3_ref, b3_ref, o_ref):
    # Linear(896 -> 256) + ReLU   (K zero-padded -> exact)
    h1 = jnp.dot(x_ref[...], w1_ref[...], preferred_element_type=jnp.float32)
    h1 = jnp.maximum(h1 + b1_ref[...], 0.0)
    # Linear(256 -> 128) + ReLU
    h2 = jnp.dot(h1.astype(w2_ref.dtype), w2_ref[...],
                 preferred_element_type=jnp.float32)
    h2 = jnp.maximum(h2 + b2_ref[...], 0.0)
    # Linear(128 -> 128-padded)   (columns 10..127 of w3/b3 are zero)
    logits = jnp.dot(h2.astype(w3_ref.dtype), w3_ref[...],
                     preferred_element_type=jnp.float32)
    o_ref[...] = (logits + b3_ref[...]).astype(o_ref.dtype)


@functools.partial(jax.jit, static_argnames=("bm", "compute_dtype"))
def _classifier_forward(x, params, *, bm, compute_dtype):
    """x: (N, 1, 28, 28) float32 (NCHW).  Returns logits (N, 10) float32."""
    w1, b1, w2, b2, w3, b3 = params
    n = x.shape[0]
    xf = x.reshape(n, -1)                       # Flatten (glue in plain JAX)
    assert xf.shape[1] == D_IN

    # Pad batch to a multiple of bm and features 784 -> 896; zero padding
    # preserves the result exactly (extra K contributes 0, extra rows sliced).
    n_pad = pl.cdiv(n, bm) * bm
    xf = jnp.pad(xf, ((0, n_pad - n), (0, D_IN_PAD - D_IN))).astype(compute_dtype)

    w1p = jnp.pad(w1, ((0, D_IN_PAD - D_IN), (0, 0))).astype(compute_dtype)
    w2p = w2.astype(compute_dtype)
    w3p = jnp.pad(w3, ((0, 0), (0, D_OUT_PAD - D_OUT))).astype(compute_dtype)
    b1p = b1.reshape(1, H1).astype(jnp.float32)
    b2p = b2.reshape(1, H2).astype(jnp.float32)
    b3p = jnp.pad(b3, (0, D_OUT_PAD - D_OUT)).reshape(1, D_OUT_PAD).astype(jnp.float32)

    grid = (n_pad // bm,)

    itemsize = jnp.dtype(compute_dtype).itemsize
    flops = 2 * n_pad * (D_IN_PAD * H1 + H1 * H2 + H2 * D_OUT_PAD)
    bytes_accessed = (
        n_pad * D_IN_PAD * itemsize                      # stream x
        + n_pad * D_OUT_PAD * 4                          # write logits (f32)
        + (w1p.size + w2p.size + w3p.size) * itemsize    # weights
        + (b1p.size + b2p.size + b3p.size) * 4           # biases
    )
    cost = pl.CostEstimate(flops=int(flops), transcendentals=0,
                           bytes_accessed=int(bytes_accessed))

    grid_spec = pltpu.PrefetchScalarGridSpec(
        num_scalar_prefetch=0,
        grid=grid,
        in_specs=[
            pl.BlockSpec((bm, D_IN_PAD), lambda i: (i, 0)),      # x tile
            pl.BlockSpec((D_IN_PAD, H1), lambda i: (0, 0)),      # w1 (resident)
            pl.BlockSpec((1, H1), lambda i: (0, 0)),             # b1
            pl.BlockSpec((H1, H2), lambda i: (0, 0)),            # w2
            pl.BlockSpec((1, H2), lambda i: (0, 0)),             # b2
            pl.BlockSpec((H2, D_OUT_PAD), lambda i: (0, 0)),     # w3 (padded)
            pl.BlockSpec((1, D_OUT_PAD), lambda i: (0, 0)),      # b3 (padded)
        ],
        out_specs=pl.BlockSpec((bm, D_OUT_PAD), lambda i: (i, 0)),
    )

    out = pl.pallas_call(
        mlp_kernel,
        out_shape=jax.ShapeDtypeStruct((n_pad, D_OUT_PAD), jnp.float32),
        grid_spec=grid_spec,
        compiler_params=pltpu.CompilerParams(
            dimension_semantics=("parallel",),
        ),
        cost_estimate=cost,
    )(xf, w1p, b1p, w2p, b2p, w3p, b3p)

    return out[:n, :D_OUT]


def classifier_forward(x, params, *, compute_dtype=jnp.bfloat16):
    """Thin wrapper: pick a batch tile that matches the batch size.

    bm is a multiple of 8 (sublane), capped at 128 (full MXU tile).  Small
    batches therefore pad to at most the next multiple of 8 instead of 128.
    """
    n = x.shape[0]
    bm = min(128, ((n + 7) // 8) * 8)
    return _classifier_forward(x, params, bm=bm, compute_dtype=compute_dtype)


def init_params(key):
    """Deterministic init mimicking torch.nn.Linear (U(-1/sqrt(fan_in), +)).
    Weights stored transposed vs. torch: (in_features, out_features)."""
    ks = jax.random.split(key, 6)

    def linear(kw, kb, fan_in, fan_out):
        bound = 1.0 / jnp.sqrt(fan_in)
        w = jax.random.uniform(kw, (fan_in, fan_out), jnp.float32, -bound, bound)
        b = jax.random.uniform(kb, (fan_out,), jnp.float32, -bound, bound)
        return w, b

    w1, b1 = linear(ks[0], ks[1], D_IN, H1)
    w2, b2 = linear(ks[2], ks[3], H1, H2)
    w3, b3 = linear(ks[4], ks[5], H2, D_OUT)
    return (w1, b1, w2, b2, w3, b3)


def reference_forward(x, params, compute_dtype=jnp.float32):
    """Pure-JAX reference.  compute_dtype=bf16 mirrors the kernel's casts."""
    w1, b1, w2, b2, w3, b3 = params
    xf = x.reshape(x.shape[0], -1).astype(compute_dtype)
    h1 = jnp.dot(xf, w1.astype(compute_dtype),
                 preferred_element_type=jnp.float32) + b1
    h1 = jnp.maximum(h1, 0.0)
    h2 = jnp.dot(h1.astype(compute_dtype), w2.astype(compute_dtype),
                 preferred_element_type=jnp.float32) + b2
    h2 = jnp.maximum(h2, 0.0)
    return jnp.dot(h2.astype(compute_dtype), w3.astype(compute_dtype),
                   preferred_element_type=jnp.float32) + b3


if __name__ == "__main__":
    key = jax.random.PRNGKey(0)
    kx, kp = jax.random.split(key)
    # MNIST-like input, small batch: (N, C, H, W) = (8, 1, 28, 28)
    x = jax.random.normal(kx, (8, 1, 28, 28), jnp.float32)
    params = init_params(kp)

    out = classifier_forward(x, params)
    out = jax.block_until_ready(out)
    assert out.shape == (8, D_OUT), out.shape

    # Tight check vs. a reference that mirrors the kernel's bf16 casts.
    ref_bf16 = reference_forward(x, params, compute_dtype=jnp.bfloat16)
    assert jnp.allclose(out, ref_bf16, atol=1e-2, rtol=1e-2), "mismatch vs bf16 reference"

    # Loose check vs. the full-f32 reference (bf16 operands -> ~1e-2 deviation).
    ref_f32 = reference_forward(x, params, compute_dtype=jnp.float32)
    assert jnp.allclose(out, ref_f32, atol=5e-2, rtol=5e-2), "mismatch vs f32 reference"

    print("KERNEL_OK")
</pallas_src>

<mosaic_0001>
module attributes {stable_mosaic.version = 11 : i64} {
  func.func @mlp_kernel(%arg0: i32, %arg1: memref<8x896xbf16, #tpu.memory_space<vmem>>, %arg2: memref<896x256xbf16, #tpu.memory_space<vmem>>, %arg3: memref<1x256xf32, #tpu.memory_space<vmem>>, %arg4: memref<256x128xbf16, #tpu.memory_space<vmem>>, %arg5: memref<1x128xf32, #tpu.memory_space<vmem>>, %arg6: memref<128x128xbf16, #tpu.memory_space<vmem>>, %arg7: memref<1x128xf32, #tpu.memory_space<vmem>>, %arg8: memref<8x128xf32, #tpu.memory_space<vmem>>) attributes {dimension_semantics = [#tpu.dimension_semantics<parallel>], iteration_bounds = array<i64: 1>, scalar_prefetch = 0 : i64, scratch_operands = 0 : i64, tpu.core_type = #tpu.core_type<tc>, window_params = [{transform_indices = @transform_0, window_bounds = array<i64: 8, 896>}, {pipeline_mode = #tpu.pipeline_mode<synchronous>, transform_indices = @transform_1, window_bounds = array<i64: 896, 256>}, {pipeline_mode = #tpu.pipeline_mode<synchronous>, transform_indices = @transform_2, window_bounds = array<i64: 1, 256>}, {pipeline_mode = #tpu.pipeline_mode<synchronous>, transform_indices = @transform_3, window_bounds = array<i64: 256, 128>}, {pipeline_mode = #tpu.pipeline_mode<synchronous>, transform_indices = @transform_4, window_bounds = array<i64: 1, 128>}, {pipeline_mode = #tpu.pipeline_mode<synchronous>, transform_indices = @transform_5, window_bounds = array<i64: 128, 128>}, {pipeline_mode = #tpu.pipeline_mode<synchronous>, transform_indices = @transform_6, window_bounds = array<i64: 1, 128>}, {transform_indices = @transform_7, window_bounds = array<i64: 8, 128>}]} {
    %c0 = arith.constant 0 : index
    %c0_0 = arith.constant 0 : index
    %0 = vector.load %arg1[%c0, %c0_0] : memref<8x896xbf16, #tpu.memory_space<vmem>>, vector<8x896xbf16>
    %c0_1 = arith.constant 0 : index
    %c0_2 = arith.constant 0 : index
    %1 = vector.load %arg2[%c0_1, %c0_2] : memref<896x256xbf16, #tpu.memory_space<vmem>>, vector<896x256xbf16>
    %cst = arith.constant dense<0.000000e+00> : vector<8x256xf32>
    %2 = tpu.matmul %0, %1, %cst {dimension_numbers = #tpu.dot_dimension_numbers<[1], [0], [0], [1], [0, 0, 1, 1], [], []>} : vector<8x896xbf16>, vector<896x256xbf16>, vector<8x256xf32> -> vector<8x256xf32>
    %c0_3 = arith.constant 0 : index
    %c0_4 = arith.constant 0 : index
    %3 = vector.load %arg3[%c0_3, %c0_4] : memref<1x256xf32, #tpu.memory_space<vmem>>, vector<1x256xf32>
    %4 = vector.broadcast %3 : vector<1x256xf32> to vector<8x256xf32>
    %5 = arith.addf %2, %4 : vector<8x256xf32>
    %cst_5 = arith.constant 0.000000e+00 : f32
    %6 = vector.broadcast %cst_5 : f32 to vector<8x256xf32>
    %7 = arith.maximumf %5, %6 : vector<8x256xf32>
    %8 = arith.truncf %7 : vector<8x256xf32> to vector<8x256xbf16>
    %c0_6 = arith.constant 0 : index
    %c0_7 = arith.constant 0 : index
    %9 = vector.load %arg4[%c0_6, %c0_7] : memref<256x128xbf16, #tpu.memory_space<vmem>>, vector<256x128xbf16>
    %cst_8 = arith.constant dense<0.000000e+00> : vector<8x128xf32>
    %10 = tpu.matmul %8, %9, %cst_8 {dimension_numbers = #tpu.dot_dimension_numbers<[1], [0], [0], [1], [0, 0, 1, 1], [], []>} : vector<8x256xbf16>, vector<256x128xbf16>, vector<8x128xf32> -> vector<8x128xf32>
    %c0_9 = arith.constant 0 : index
    %c0_10 = arith.constant 0 : index
    %11 = vector.load %arg5[%c0_9, %c0_10] : memref<1x128xf32, #tpu.memory_space<vmem>>, vector<1x128xf32>
    %12 = vector.broadcast %11 : vector<1x128xf32> to vector<8x128xf32>
    %13 = arith.addf %10, %12 : vector<8x128xf32>
    %cst_11 = arith.constant 0.000000e+00 : f32
    %14 = vector.broadcast %cst_11 : f32 to vector<8x128xf32>
    %15 = arith.maximumf %13, %14 : vector<8x128xf32>
    %16 = arith.truncf %15 : vector<8x128xf32> to vector<8x128xbf16>
    %c0_12 = arith.constant 0 : index
    %c0_13 = arith.constant 0 : index
    %17 = vector.load %arg6[%c0_12, %c0_13] : memref<128x128xbf16, #tpu.memory_space<vmem>>, vector<128x128xbf16>
    %cst_14 = arith.constant dense<0.000000e+00> : vector<8x128xf32>
    %18 = tpu.matmul %16, %17, %cst_14 {dimension_numbers = #tpu.dot_dimension_numbers<[1], [0], [0], [1], [0, 0, 1, 1], [], []>} : vector<8x128xbf16>, vector<128x128xbf16>, vector<8x128xf32> -> vector<8x128xf32>
    %c0_15 = arith.constant 0 : index
    %c0_16 = arith.constant 0 : index
    %19 = vector.load %arg7[%c0_15, %c0_16] : memref<1x128xf32, #tpu.memory_space<vmem>>, vector<1x128xf32>
    %20 = vector.broadcast %19 : vector<1x128xf32> to vector<8x128xf32>
    %21 = arith.addf %18, %20 : vector<8x128xf32>
    %c0_17 = arith.constant 0 : index
    %c0_18 = arith.constant 0 : index
    %22 = vector.load %arg8[%c0_17, %c0_18] : memref<8x128xf32, #tpu.memory_space<vmem>>, vector<8x128xf32>
    tpu.vector_store %arg8[%c0_17, %c0_18], %21 {strides = array<i32>} : memref<8x128xf32, #tpu.memory_space<vmem>>, vector<8x128xf32>,
    return
  }
  func.func @transform_0(%arg0: i32) -> (i32, i32) {
    %c0_i32 = arith.constant 0 : i32
    %c0_i32_0 = arith.constant 0 : i32
    return %arg0, %c0_i32 : i32, i32
  }
  func.func @transform_1(%arg0: i32) -> (i32, i32) {
    %c0_i32 = arith.constant 0 : i32
    %c0_i32_0 = arith.constant 0 : i32
    %c0_i32_1 = arith.constant 0 : i32
    return %c0_i32, %c0_i32_0 : i32, i32
  }
  func.func @transform_2(%arg0: i32) -> (i32, i32) {
    %c0_i32 = arith.constant 0 : i32
    %c0_i32_0 = arith.constant 0 : i32
    %c0_i32_1 = arith.constant 0 : i32
    return %c0_i32, %c0_i32_0 : i32, i32
  }
  func.func @transform_3(%arg0: i32) -> (i32, i32) {
    %c0_i32 = arith.constant 0 : i32
    %c0_i32_0 = arith.constant 0 : i32
    %c0_i32_1 = arith.constant 0 : i32
    return %c0_i32, %c0_i32_0 : i32, i32
  }
  func.func @transform_4(%arg0: i32) -> (i32, i32) {
    %c0_i32 = arith.constant 0 : i32
    %c0_i32_0 = arith.constant 0 : i32
    %c0_i32_1 = arith.constant 0 : i32
    return %c0_i32, %c0_i32_0 : i32, i32
  }
  func.func @transform_5(%arg0: i32) -> (i32, i32) {
    %c0_i32 = arith.constant 0 : i32
    %c0_i32_0 = arith.constant 0 : i32
    %c0_i32_1 = arith.constant 0 : i32
    return %c0_i32, %c0_i32_0 : i32, i32
  }
  func.func @transform_6(%arg0: i32) -> (i32, i32) {
    %c0_i32 = arith.constant 0 : i32
    %c0_i32_0 = arith.constant 0 : i32
    %c0_i32_1 = arith.constant 0 : i32
    return %c0_i32, %c0_i32_0 : i32, i32
  }
  func.func @transform_7(%arg0: i32) -> (i32, i32) {
    %c0_i32 = arith.constant 0 : i32
    %c0_i32_0 = arith.constant 0 : i32
    return %arg0, %c0_i32 : i32, i32
  }
}

</mosaic_0001>

<llo_original>
// kernel: _classifier_forward.1
$region0: #{_classifier_forward.1}
  #allocation0 [shape = 'u32[]', space=smem, size = 0x4, offset = 0x4, fixed_abs, tag = 'smem constant byte address 0x4 - core index']
  #allocation1 [shape = 'u32[144,128]{1,0:T(1,128)}', space=vmem, size = 0x12000, scoped, tag = 'internal scratch']
  %s0 = inlined_call_operand.vmem [shape: bf16[8,896], index: 0, kind: input, shape index: {}]
  %s1 = inlined_call_operand.vmem [shape: bf16[896,256], index: 1, kind: input, shape index: {}]
  %s2 = inlined_call_operand.vmem [shape: f32[1,256], index: 2, kind: input, shape index: {}]
  %s3 = inlined_call_operand.vmem [shape: bf16[256,128], index: 3, kind: input, shape index: {}]
  %s4 = inlined_call_operand.vmem [shape: f32[1,128], index: 4, kind: input, shape index: {}]
  %s5 = inlined_call_operand.vmem [shape: bf16[128,128], index: 5, kind: input, shape index: {}]
  %s6 = inlined_call_operand.vmem [shape: f32[1,128], index: 6, kind: input, shape index: {}]
  %s7 = inlined_call_operand.hbm [shape: f32[8,128], index: 7, kind: output, shape index: {}]
  %s8 = sld [smem:[#allocation0]]
  $region38: #{_classifier_forward.1} parent=0
    _
  %s10 = ssub.s32 1, %s8
  %s11 = scalar_select 0, %s10, %s8
  $region1: #{_classifier_forward.1} parent=0
    #allocation2 [shape = 'u8[4096]{0}', space=vmem, size = 0x1000, scoped, tag = 'output window, operand 0, single buffered']
    #allocation3 [shape = 's32[1]{0}', space=sflag, size = 0x4, scoped, tag = 'scoped memory for _classifier_forward.1']
    %12 = vsyncpa [#allocation3], 0
    // Predicated region
    $region2: #{_classifier_forward.1} parent=1 // pred_check
      _
    $region3: #{_classifier_forward.1} parent=1 // pred_check_branch
      %14 = sbr.rel (0) target = $region5
    $region4: #{_classifier_forward.1} parent=1 // pred_region
      _
    $region5: #{_classifier_forward.1} parent=1 // pred_fallthru
      _
    // Predicated region
    $region6: #{_classifier_forward.1} parent=1 // pred_check
      _
    $region7: #{_classifier_forward.1} parent=1 // pred_check_branch
      %16 = sbr.rel (0) target = $region9
    $region8: #{_classifier_forward.1} parent=1 // pred_region
      _
    $region9: #{_classifier_forward.1} parent=1 // pred_fallthru
      _
    // Predicated region
    $region10: #{_classifier_forward.1} parent=1 // pred_check
      _
    $region11: #{_classifier_forward.1} parent=1 // pred_check_branch
      %18 = sbr.rel (0) target = $region13
    $region12: #{_classifier_forward.1} parent=1 // pred_region
      _
    $region13: #{_classifier_forward.1} parent=1 // pred_fallthru
      _
    // Predicated region
    $region14: #{_classifier_forward.1} parent=1 // pred_check
      _
    $region15: #{_classifier_forward.1} parent=1 // pred_check_branch
      %20 = sbr.rel (0) target = $region17
    $region16: #{_classifier_forward.1} parent=1 // pred_region
      _
    $region17: #{_classifier_forward.1} parent=1 // pred_fallthru
      _
    // Predicated region
    $region18: #{_classifier_forward.1} parent=1 // pred_check
      _
    $region19: #{_classifier_forward.1} parent=1 // pred_check_branch
      %22 = sbr.rel (0) target = $region21
    $region20: #{_classifier_forward.1} parent=1 // pred_region
      _
    $region21: #{_classifier_forward.1} parent=1 // pred_fallthru
      _
    // Predicated region
    $region22: #{_classifier_forward.1} parent=1 // pred_check
      _
    $region23: #{_classifier_forward.1} parent=1 // pred_check_branch
      %24 = sbr.rel (0) target = $region25
    $region24: #{_classifier_forward.1} parent=1 // pred_region
      _
    $region25: #{_classifier_forward.1} parent=1 // pred_fallthru
      _
    // Predicated region
    $region26: #{_classifier_forward.1} parent=1 // pred_check
      _
    $region27: #{_classifier_forward.1} parent=1 // pred_check_branch
      %26 = sbr.rel (0) target = $region29
    $region28: #{_classifier_forward.1} parent=1 // pred_region
      _
    $region29: #{_classifier_forward.1} parent=1 // pred_fallthru
      _
    %v28 = vld [vmem:[%s0] sm:$0xff]
    %v29 = vld [vmem:[%s0 + $0x8] sm:$0xff]
    %v30 = vld [vmem:[%s0 + $0x10] sm:$0xff]
    %v31 = vld [vmem:[%s0 + $0x18] sm:$0xf]
    %v32 = vld [vmem:[%s1] sm:$0xff]
    %v33 = vld [vmem:[%s1 + $0x8] sm:$0xff]
    %v34 = vld [vmem:[%s1 + $0x10] sm:$0xff]
    %v35 = vld [vmem:[%s1 + $0x18] sm:$0xff]
    %v36 = vld [vmem:[%s1 + $0x20] sm:$0xff]
    %v37 = vld [vmem:[%s1 + $0x28] sm:$0xff]
    %v38 = vld [vmem:[%s1 + $0x30] sm:$0xff]
    %v39 = vld [vmem:[%s1 + $0x38] sm:$0xff]
    %v40 = vld [vmem:[%s1 + $0x40] sm:$0xff]
    %v41 = vld [vmem:[%s1 + $0x48] sm:$0xff]
    %v42 = vld [vmem:[%s1 + $0x50] sm:$0xff]
    %v43 = vld [vmem:[%s1 + $0x58] sm:$0xff]
    %v44 = vld [vmem:[%s1 + $0x60] sm:$0xff]
    %v45 = vld [vmem:[%s1 + $0x68] sm:$0xff]
    %v46 = vld [vmem:[%s1 + $0x70] sm:$0xff]
    %v47 = vld [vmem:[%s1 + $0x78] sm:$0xff]
    %v48 = vld [vmem:[%s1 + $0x80] sm:$0xff]
    %v49 = vld [vmem:[%s1 + $0x88] sm:$0xff]
    %v50 = vld [vmem:[%s1 + $0x90] sm:$0xff]
    %v51 = vld [vmem:[%s1 + $0x98] sm:$0xff]
    %v52 = vld [vmem:[%s1 + $0xa0] sm:$0xff]
    %v53 = vld [vmem:[%s1 + $0xa8] sm:$0xff]
    %v54 = vld [vmem:[%s1 + $0xb0] sm:$0xff]
    %v55 = vld [vmem:[%s1 + $0xb8] sm:$0xff]
    %v56 = vld [vmem:[%s1 + $0xc0] sm:$0xff]
    %v57 = vld [vmem:[%s1 + $0xc8] sm:$0xff]
    %v58 = vld [vmem:[%s1 + $0xd0] sm:$0xff]
    %v59 = vld [vmem:[%s1 + $0xd8] sm:$0xff]
    %v60 = vld [vmem:[%s1 + $0xe0] sm:$0xff]
    %v61 = vld [vmem:[%s1 + $0xe8] sm:$0xff]
    %v62 = vld [vmem:[%s1 + $0xf0] sm:$0xff]
    %v63 = vld [vmem:[%s1 + $0xf8] sm:$0xff]
    %v64 = vld [vmem:[%s1 + $0x100] sm:$0xff]
    %v65 = vld [vmem:[%s1 + $0x108] sm:$0xff]
    %v66 = vld [vmem:[%s1 + $0x110] sm:$0xff]
    %v67 = vld [vmem:[%s1 + $0x118] sm:$0xff]
    %v68 = vld [vmem:[%s1 + $0x120] sm:$0xff]
    %v69 = vld [vmem:[%s1 + $0x128] sm:$0xff]
    %v70 = vld [vmem:[%s1 + $0x130] sm:$0xff]
    %v71 = vld [vmem:[%s1 + $0x138] sm:$0xff]
    %v72 = vld [vmem:[%s1 + $0x140] sm:$0xff]
    %v73 = vld [vmem:[%s1 + $0x148] sm:$0xff]
    %v74 = vld [vmem:[%s1 + $0x150] sm:$0xff]
    %v75 = vld [vmem:[%s1 + $0x158] sm:$0xff]
    %v76 = vld [vmem:[%s1 + $0x160] sm:$0xff]
    %v77 = vld [vmem:[%s1 + $0x168] sm:$0xff]
    %v78 = vld [vmem:[%s1 + $0x170] sm:$0xff]
    %v79 = vld [vmem:[%s1 + $0x178] sm:$0xff]
    %v80 = vld [vmem:[%s1 + $0x180] sm:$0xff]
    %v81 = vld [vmem:[%s1 + $0x188] sm:$0xff]
    %v82 = vld [vmem:[%s1 + $0x190] sm:$0xff]
    %v83 = vld [vmem:[%s1 + $0x198] sm:$0xff]
    %v84 = vld [vmem:[%s1 + $0x1a0] sm:$0xff]
    %v85 = vld [vmem:[%s1 + $0x1a8] sm:$0xff]
    %v86 = vld [vmem:[%s1 + $0x1b0] sm:$0xff]
    %v87 = vld [vmem:[%s1 + $0x1b8] sm:$0xff]
    %v88 = vld [vmem:[%s1 + $0x1c0] sm:$0xff]
    %v89 = vld [vmem:[%s1 + $0x1c8] sm:$0xff]
    %v90 = vld [vmem:[%s1 + $0x1d0] sm:$0xff]
    %v91 = vld [vmem:[%s1 + $0x1d8] sm:$0xff]
    %v92 = vld [vmem:[%s1 + $0x1e0] sm:$0xff]
    %v93 = vld [vmem:[%s1 + $0x1e8] sm:$0xff]
    %v94 = vld [vmem:[%s1 + $0x1f0] sm:$0xff]
    %v95 = vld [vmem:[%s1 + $0x1f8] sm:$0xff]
    %v96 = vld [vmem:[%s1 + $0x200] sm:$0xff]
    %v97 = vld [vmem:[%s1 + $0x208] sm:$0xff]
    %v98 = vld [vmem:[%s1 + $0x210] sm:$0xff]
    %v99 = vld [vmem:[%s1 + $0x218] sm:$0xff]
    %v100 = vld [vmem:[%s1 + $0x220] sm:$0xff]
    %v101 = vld [vmem:[%s1 + $0x228] sm:$0xff]
    %v102 = vld [vmem:[%s1 + $0x230] sm:$0xff]
    %v103 = vld [vmem:[%s1 + $0x238] sm:$0xff]
    %v104 = vld [vmem:[%s1 + $0x240] sm:$0xff]
    %v105 = vld [vmem:[%s1 + $0x248] sm:$0xff]
    %v106 = vld [vmem:[%s1 + $0x250] sm:$0xff]
    %v107 = vld [vmem:[%s1 + $0x258] sm:$0xff]
    %v108 = vld [vmem:[%s1 + $0x260] sm:$0xff]
    %v109 = vld [vmem:[%s1 + $0x268] sm:$0xff]
    %v110 = vld [vmem:[%s1 + $0x270] sm:$0xff]
    %v111 = vld [vmem:[%s1 + $0x278] sm:$0xff]
    %v112 = vld [vmem:[%s1 + $0x280] sm:$0xff]
    %v113 = vld [vmem:[%s1 + $0x288] sm:$0xff]
    %v114 = vld [vmem:[%s1 + $0x290] sm:$0xff]
    %v115 = vld [vmem:[%s1 + $0x298] sm:$0xff]
    %v116 = vld [vmem:[%s1 + $0x2a0] sm:$0xff]
    %v117 = vld [vmem:[%s1 + $0x2a8] sm:$0xff]
    %v118 = vld [vmem:[%s1 + $0x2b0] sm:$0xff]
    %v119 = vld [vmem:[%s1 + $0x2b8] sm:$0xff]
    %v120 = vld [vmem:[%s1 + $0x2c0] sm:$0xff]
    %v121 = vld [vmem:[%s1 + $0x2c8] sm:$0xff]
    %v122 = vld [vmem:[%s1 + $0x2d0] sm:$0xff]
    %v123 = vld [vmem:[%s1 + $0x2d8] sm:$0xff]
    %v124 = vld [vmem:[%s1 + $0x2e0] sm:$0xff]
    %v125 = vld [vmem:[%s1 + $0x2e8] sm:$0xff]
    %v126 = vld [vmem:[%s1 + $0x2f0] sm:$0xff]
    %v127 = vld [vmem:[%s1 + $0x2f8] sm:$0xff]
    %v128 = vld [vmem:[%s1 + $0x300] sm:$0xff]
    %v129 = vld [vmem:[%s1 + $0x308] sm:$0xff]
    %v130 = vld [vmem:[%s1 + $0x310] sm:$0xff]
    %v131 = vld [vmem:[%s1 + $0x318] sm:$0xff]
    %v132 = vld [vmem:[%s1 + $0x320] sm:$0xff]
    %v133 = vld [vmem:[%s1 + $0x328] sm:$0xff]
    %v134 = vld [vmem:[%s1 + $0x330] sm:$0xff]
    %v135 = vld [vmem:[%s1 + $0x338] sm:$0xff]
    %v136 = vld [vmem:[%s1 + $0x340] sm:$0xff]
    %v137 = vld [vmem:[%s1 + $0x348] sm:$0xff]
    %v138 = vld [vmem:[%s1 + $0x350] sm:$0xff]
    %v139 = vld [vmem:[%s1 + $0x358] sm:$0xff]
    %v140 = vld [vmem:[%s1 + $0x360] sm:$0xff]
    %v141 = vld [vmem:[%s1 + $0x368] sm:$0xff]
    %v142 = vld [vmem:[%s1 + $0x370] sm:$0xff]
    %v143 = vld [vmem:[%s1 + $0x378] sm:$0xff]
    %v144 = vld [vmem:[%s2] sm:$0x3]
    %v146 = vlaneseq
    %v147 = vshrl.u32 %v146, 7
    %v148 = vsub.s32 0, %v147
    %v149 = vrot.slane %v144, %v148
    %v150 = vlaneseq
    %v151 = vshrl.u32 %v150, 7
    %v152 = vsub.s32 1, %v151
    %v153 = vrot.slane %v144, %v152
    %v160 = vunpack.c.l.b16 %v28
    %v161 = vunpack.c.h.b16 %v28
    %v162 = vunpack.c.l.b16 %v29
    %v163 = vunpack.c.h.b16 %v29
    %v164 = vunpack.c.l.b16 %v30
    %v165 = vunpack.c.h.b16 %v30
    %v166 = vunpack.c.l.b16 %v31
    %v167 = vpack.c.b16 %v160, %v160
    %v168 = vpack.c.b16 %v161, %v161
    %v169 = vpack.c.b16 %v162, %v162
    %v170 = vpack.c.b16 %v163, %v163
    %v171 = vpack.c.b16 %v164, %v164
    %v172 = vpack.c.b16 %v165, %v165
    %v173 = vpack.c.b16 %v166, %v166
    %v293 = vunpack.c.l.b16 %v32
    %v294 = vunpack.c.h.b16 %v32
    %v295 = vunpack.c.l.b16 %v33
    %v296 = vunpack.c.h.b16 %v33
    %v297 = vunpack.c.l.b16 %v34
    %v298 = vunpack.c.h.b16 %v34
    %v299 = vunpack.c.l.b16 %v35
    %v300 = vunpack.c.h.b16 %v35
    %v301 = vunpack.c.l.b16 %v36
    %v302 = vunpack.c.h.b16 %v36
    %v303 = vunpack.c.l.b16 %v37
    %v304 = vunpack.c.h.b16 %v37
    %v305 = vunpack.c.l.b16 %v38
    %v306 = vunpack.c.h.b16 %v38
    %v307 = vunpack.c.l.b16 %v39
    %v308 = vunpack.c.h.b16 %v39
    %v309 = vunpack.c.l.b16 %v40
    %v310 = vunpack.c.h.b16 %v40
    %v311 = vunpack.c.l.b16 %v41
    %v312 = vunpack.c.h.b16 %v41
    %v313 = vunpack.c.l.b16 %v42
    %v314 = vunpack.c.h.b16 %v42
    %v315 = vunpack.c.l.b16 %v43
    %v316 = vunpack.c.h.b16 %v43
    %v317 = vunpack.c.l.b16 %v44
    %v318 = vunpack.c.h.b16 %v44
    %v319 = vunpack.c.l.b16 %v45
    %v320 = vunpack.c.h.b16 %v45
    %v321 = vunpack.c.l.b16 %v46
    %v322 = vunpack.c.h.b16 %v46
    %v323 = vunpack.c.l.b16 %v47
    %v324 = vunpack.c.h.b16 %v47
    %v325 = vunpack.c.l.b16 %v48
    %v326 = vunpack.c.h.b16 %v48
    %v327 = vunpack.c.l.b16 %v49
    %v328 = vunpack.c.h.b16 %v49
    %v329 = vunpack.c.l.b16 %v50
    %v330 = vunpack.c.h.b16 %v50
    %v331 = vunpack.c.l.b16 %v51
    %v332 = vunpack.c.h.b16 %v51
    %v333 = vunpack.c.l.b16 %v52
    %v334 = vunpack.c.h.b16 %v52
    %v335 = vunpack.c.l.b16 %v53
    %v336 = vunpack.c.h.b16 %v53
    %v337 = vunpack.c.l.b16 %v54
    %v338 = vunpack.c.h.b16 %v54
    %v339 = vunpack.c.l.b16 %v55
    %v340 = vunpack.c.h.b16 %v55
    %v341 = vunpack.c.l.b16 %v56
    %v342 = vunpack.c.h.b16 %v56
    %v343 = vunpack.c.l.b16 %v57
    %v344 = vunpack.c.h.b16 %v57
    %v345 = vunpack.c.l.b16 %v58
    %v346 = vunpack.c.h.b16 %v58
    %v347 = vunpack.c.l.b16 %v59
    %v348 = vunpack.c.h.b16 %v59
    %v349 = vunpack.c.l.b16 %v60
    %v350 = vunpack.c.h.b16 %v60
    %v351 = vunpack.c.l.b16 %v61
    %v352 = vunpack.c.h.b16 %v61
    %v353 = vunpack.c.l.b16 %v62
    %v354 = vunpack.c.h.b16 %v62
    %v355 = vunpack.c.l.b16 %v63
    %v356 = vunpack.c.h.b16 %v63
    %v357 = vunpack.c.l.b16 %v64
    %v358 = vunpack.c.h.b16 %v64
    %v359 = vunpack.c.l.b16 %v65
    %v360 = vunpack.c.h.b16 %v65
    %v361 = vunpack.c.l.b16 %v66
    %v362 = vunpack.c.h.b16 %v66
    %v363 = vunpack.c.l.b16 %v67
    %v364 = vunpack.c.h.b16 %v67
    %v365 = vunpack.c.l.b16 %v68
    %v366 = vunpack.c.h.b16 %v68
    %v367 = vunpack.c.l.b16 %v69
    %v368 = vunpack.c.h.b16 %v69
    %v369 = vunpack.c.l.b16 %v70
    %v370 = vunpack.c.h.b16 %v70
    %v371 = vunpack.c.l.b16 %v71
    %v372 = vunpack.c.h.b16 %v71
    %v373 = vunpack.c.l.b16 %v72
    %v374 = vunpack.c.h.b16 %v72
    %v375 = vunpack.c.l.b16 %v73
    %v376 = vunpack.c.h.b16 %v73
    %v377 = vunpack.c.l.b16 %v74
    %v378 = vunpack.c.h.b16 %v74
    %v379 = vunpack.c.l.b16 %v75
    %v380 = vunpack.c.h.b16 %v75
    %v381 = vunpack.c.l.b16 %v76
    %v382 = vunpack.c.h.b16 %v76
    %v383 = vunpack.c.l.b16 %v77
    %v384 = vunpack.c.h.b16 %v77
    %v385 = vunpack.c.l.b16 %v78
    %v386 = vunpack.c.h.b16 %v78
    %v387 = vunpack.c.l.b16 %v79
    %v388 = vunpack.c.h.b16 %v79
    %v389 = vunpack.c.l.b16 %v80
    %v390 = vunpack.c.h.b16 %v80
    %v391 = vunpack.c.l.b16 %v81
    %v392 = vunpack.c.h.b16 %v81
    %v393 = vunpack.c.l.b16 %v82
    %v394 = vunpack.c.h.b16 %v82
    %v395 = vunpack.c.l.b16 %v83
    %v396 = vunpack.c.h.b16 %v83
    %v397 = vunpack.c.l.b16 %v84
    %v398 = vunpack.c.h.b16 %v84
    %v399 = vunpack.c.l.b16 %v85
    %v400 = vunpack.c.h.b16 %v85
    %v401 = vunpack.c.l.b16 %v86
    %v402 = vunpack.c.h.b16 %v86
    %v403 = vunpack.c.l.b16 %v87
    %v404 = vunpack.c.h.b16 %v87
    %v405 = vunpack.c.l.b16 %v88
    %v406 = vunpack.c.h.b16 %v88
    %v407 = vunpack.c.l.b16 %v89
    %v408 = vunpack.c.h.b16 %v89
    %v409 = vunpack.c.l.b16 %v90
    %v410 = vunpack.c.h.b16 %v90
    %v411 = vunpack.c.l.b16 %v91
    %v412 = vunpack.c.h.b16 %v91
    %v413 = vunpack.c.l.b16 %v92
    %v414 = vunpack.c.h.b16 %v92
    %v415 = vunpack.c.l.b16 %v93
    %v416 = vunpack.c.h.b16 %v93
    %v417 = vunpack.c.l.b16 %v94
    %v418 = vunpack.c.h.b16 %v94
    %v419 = vunpack.c.l.b16 %v95
    %v420 = vunpack.c.h.b16 %v95
    %v421 = vunpack.c.l.b16 %v96
    %v422 = vunpack.c.h.b16 %v96
    %v423 = vunpack.c.l.b16 %v97
    %v424 = vunpack.c.h.b16 %v97
    %v425 = vunpack.c.l.b16 %v98
    %v426 = vunpack.c.h.b16 %v98
    %v427 = vunpack.c.l.b16 %v99
    %v428 = vunpack.c.h.b16 %v99
    %v429 = vunpack.c.l.b16 %v100
    %v430 = vunpack.c.h.b16 %v100
    %v431 = vunpack.c.l.b16 %v101
    %v432 = vunpack.c.h.b16 %v101
    %v433 = vunpack.c.l.b16 %v102
    %v434 = vunpack.c.h.b16 %v102
    %v435 = vunpack.c.l.b16 %v103
    %v436 = vunpack.c.h.b16 %v103
    %v437 = vunpack.c.l.b16 %v104
    %v438 = vunpack.c.h.b16 %v104
    %v439 = vunpack.c.l.b16 %v105
    %v440 = vunpack.c.h.b16 %v105
    %v441 = vunpack.c.l.b16 %v106
    %v442 = vunpack.c.h.b16 %v106
    %v443 = vunpack.c.l.b16 %v107
    %v444 = vunpack.c.h.b16 %v107
    %v445 = vunpack.c.l.b16 %v108
    %v446 = vunpack.c.h.b16 %v108
    %v447 = vunpack.c.l.b16 %v109
    %v448 = vunpack.c.h.b16 %v109
    %v449 = vunpack.c.l.b16 %v110
    %v450 = vunpack.c.h.b16 %v110
    %v451 = vunpack.c.l.b16 %v111
    %v452 = vunpack.c.h.b16 %v111
    %v453 = vunpack.c.l.b16 %v112
    %v454 = vunpack.c.h.b16 %v112
    %v455 = vunpack.c.l.b16 %v113
    %v456 = vunpack.c.h.b16 %v113
    %v457 = vunpack.c.l.b16 %v114
    %v458 = vunpack.c.h.b16 %v114
    %v459 = vunpack.c.l.b16 %v115
    %v460 = vunpack.c.h.b16 %v115
    %v461 = vunpack.c.l.b16 %v116
    %v462 = vunpack.c.h.b16 %v116
    %v463 = vunpack.c.l.b16 %v117
    %v464 = vunpack.c.h.b16 %v117
    %v465 = vunpack.c.l.b16 %v118
    %v466 = vunpack.c.h.b16 %v118
    %v467 = vunpack.c.l.b16 %v119
    %v468 = vunpack.c.h.b16 %v119
    %v469 = vunpack.c.l.b16 %v120
    %v470 = vunpack.c.h.b16 %v120
    %v471 = vunpack.c.l.b16 %v121
    %v472 = vunpack.c.h.b16 %v121
    %v473 = vunpack.c.l.b16 %v122
    %v474 = vunpack.c.h.b16 %v122
    %v475 = vunpack.c.l.b16 %v123
    %v476 = vunpack.c.h.b16 %v123
    %v477 = vunpack.c.l.b16 %v124
    %v478 = vunpack.c.h.b16 %v124
    %v479 = vunpack.c.l.b16 %v125
    %v480 = vunpack.c.h.b16 %v125
    %v481 = vunpack.c.l.b16 %v126
    %v482 = vunpack.c.h.b16 %v126
    %v483 = vunpack.c.l.b16 %v127
    %v484 = vunpack.c.h.b16 %v127
    %v485 = vunpack.c.l.b16 %v128
    %v486 = vunpack.c.h.b16 %v128
    %v487 = vunpack.c.l.b16 %v129
    %v488 = vunpack.c.h.b16 %v129
    %v489 = vunpack.c.l.b16 %v130
    %v490 = vunpack.c.h.b16 %v130
    %v491 = vunpack.c.l.b16 %v131
    %v492 = vunpack.c.h.b16 %v131
    %v493 = vunpack.c.l.b16 %v132
    %v494 = vunpack.c.h.b16 %v132
    %v495 = vunpack.c.l.b16 %v133
    %v496 = vunpack.c.h.b16 %v133
    %v497 = vunpack.c.l.b16 %v134
    %v498 = vunpack.c.h.b16 %v134
    %v499 = vunpack.c.l.b16 %v135
    %v500 = vunpack.c.h.b16 %v135
    %v501 = vunpack.c.l.b16 %v136
    %v502 = vunpack.c.h.b16 %v136
    %v503 = vunpack.c.l.b16 %v137
    %v504 = vunpack.c.h.b16 %v137
    %v505 = vunpack.c.l.b16 %v138
    %v506 = vunpack.c.h.b16 %v138
    %v507 = vunpack.c.l.b16 %v139
    %v508 = vunpack.c.h.b16 %v139
    %v509 = vunpack.c.l.b16 %v140
    %v510 = vunpack.c.h.b16 %v140
    %v511 = vunpack.c.l.b16 %v141
    %v512 = vunpack.c.h.b16 %v141
    %v513 = vunpack.c.l.b16 %v142
    %v514 = vunpack.c.h.b16 %v142
    %v515 = vunpack.c.l.b16 %v143
    %v516 = vunpack.c.h.b16 %v143
    %v517 = vpack.c.b16 %v295, %v293
    %v518 = vpack.c.b16 %v296, %v294
    %v519 = vpack.c.b16 %v299, %v297
    %v520 = vpack.c.b16 %v300, %v298
    %v521 = vpack.c.b16 %v303, %v301
    %v522 = vpack.c.b16 %v304, %v302
    %v523 = vpack.c.b16 %v307, %v305
    %v524 = vpack.c.b16 %v308, %v306
    %v525 = vpack.c.b16 %v311, %v309
    %v526 = vpack.c.b16 %v312, %v310
    %v527 = vpack.c.b16 %v315, %v313
    %v528 = vpack.c.b16 %v316, %v314
    %v529 = vpack.c.b16 %v319, %v317
    %v530 = vpack.c.b16 %v320, %v318
    %v531 = vpack.c.b16 %v323, %v321
    %v532 = vpack.c.b16 %v324, %v322
    %v533 = vpack.c.b16 %v327, %v325
    %v534 = vpack.c.b16 %v328, %v326
    %v535 = vpack.c.b16 %v331, %v329
    %v536 = vpack.c.b16 %v332, %v330
    %v537 = vpack.c.b16 %v335, %v333
    %v538 = vpack.c.b16 %v336, %v334
    %v539 = vpack.c.b16 %v339, %v337
    %v540 = vpack.c.b16 %v340, %v338
    %v541 = vpack.c.b16 %v343, %v341
    %v542 = vpack.c.b16 %v344, %v342
    %v543 = vpack.c.b16 %v347, %v345
    %v544 = vpack.c.b16 %v348, %v346
    %v545 = vpack.c.b16 %v351, %v349
    %v546 = vpack.c.b16 %v352, %v350
    %v547 = vpack.c.b16 %v355, %v353
    %v548 = vpack.c.b16 %v356, %v354
    %v549 = vpack.c.b16 %v359, %v357
    %v550 = vpack.c.b16 %v360, %v358
    %v551 = vpack.c.b16 %v363, %v361
    %v552 = vpack.c.b16 %v364, %v362
    %v553 = vpack.c.b16 %v367, %v365
    %v554 = vpack.c.b16 %v368, %v366
    %v555 = vpack.c.b16 %v371, %v369
    %v556 = vpack.c.b16 %v372, %v370
    %v557 = vpack.c.b16 %v375, %v373
    %v558 = vpack.c.b16 %v376, %v374
    %v559 = vpack.c.b16 %v379, %v377
    %v560 = vpack.c.b16 %v380, %v378
    %v561 = vpack.c.b16 %v383, %v381
    %v562 = vpack.c.b16 %v384, %v382
    %v563 = vpack.c.b16 %v387, %v385
    %v564 = vpack.c.b16 %v388, %v386
    %v565 = vpack.c.b16 %v391, %v389
    %v566 = vpack.c.b16 %v392, %v390
    %v567 = vpack.c.b16 %v395, %v393
    %v568 = vpack.c.b16 %v396, %v394
    %v569 = vpack.c.b16 %v399, %v397
    %v570 = vpack.c.b16 %v400, %v398
    %v571 = vpack.c.b16 %v403, %v401
    %v572 = vpack.c.b16 %v404, %v402
    %v573 = vpack.c.b16 %v407, %v405
    %v574 = vpack.c.b16 %v408, %v406
    %v575 = vpack.c.b16 %v411, %v409
    %v576 = vpack.c.b16 %v412, %v410
    %v577 = vpack.c.b16 %v415, %v413
    %v578 = vpack.c.b16 %v416, %v414
    %v579 = vpack.c.b16 %v419, %v417
    %v580 = vpack.c.b16 %v420, %v418
    %v581 = vpack.c.b16 %v423, %v421
    %v582 = vpack.c.b16 %v424, %v422
    %v583 = vpack.c.b16 %v427, %v425
    %v584 = vpack.c.b16 %v428, %v426
    %v585 = vpack.c.b16 %v431, %v429
    %v586 = vpack.c.b16 %v432, %v430
    %v587 = vpack.c.b16 %v435, %v433
    %v588 = vpack.c.b16 %v436, %v434
    %v589 = vpack.c.b16 %v439, %v437
    %v590 = vpack.c.b16 %v440, %v438
    %v591 = vpack.c.b16 %v443, %v441
    %v592 = vpack.c.b16 %v444, %v442
    %v593 = vpack.c.b16 %v447, %v445
    %v594 = vpack.c.b16 %v448, %v446
    %v595 = vpack.c.b16 %v451, %v449
    %v596 = vpack.c.b16 %v452, %v450
    %v597 = vpack.c.b16 %v455, %v453
    %v598 = vpack.c.b16 %v456, %v454
    %v599 = vpack.c.b16 %v459, %v457
    %v600 = vpack.c.b16 %v460, %v458
    %v601 = vpack.c.b16 %v463, %v461
    %v602 = vpack.c.b16 %v464, %v462
    %v603 = vpack.c.b16 %v467, %v465
    %v604 = vpack.c.b16 %v468, %v466
    %v605 = vpack.c.b16 %v471, %v469
    %v606 = vpack.c.b16 %v472, %v470
    %v607 = vpack.c.b16 %v475, %v473
    %v608 = vpack.c.b16 %v476, %v474
    %v609 = vpack.c.b16 %v479, %v477
    %v610 = vpack.c.b16 %v480, %v478
    %v611 = vpack.c.b16 %v483, %v481
    %v612 = vpack.c.b16 %v484, %v482
    %v613 = vpack.c.b16 %v487, %v485
    %v614 = vpack.c.b16 %v488, %v486
    %v615 = vpack.c.b16 %v491, %v489
    %v616 = vpack.c.b16 %v492, %v490
    %v617 = vpack.c.b16 %v495, %v493
    %v618 = vpack.c.b16 %v496, %v494
    %v619 = vpack.c.b16 %v499, %v497
    %v620 = vpack.c.b16 %v500, %v498
    %v621 = vpack.c.b16 %v503, %v501
    %v622 = vpack.c.b16 %v504, %v502
    %v623 = vpack.c.b16 %v507, %v505
    %v624 = vpack.c.b16 %v508, %v506
    %v625 = vpack.c.b16 %v511, %v509
    %v626 = vpack.c.b16 %v512, %v510
    %v627 = vpack.c.b16 %v515, %v513
    %v628 = vpack.c.b16 %v516, %v514
    %741 = vmatprep.subr.bf16.mxu0 %v532
    %742 = vmatpush1.bf16.msra.mxu0 %v531
    %743 = vmatprep.subr.bf16.mxu0 %v530
    %744 = vmatpush1.bf16.msra.mxu0 %v529
    %745 = vmatprep.subr.bf16.mxu0 %v528
    %746 = vmatpush1.bf16.msra.mxu0 %v527
    %747 = vmatprep.subr.bf16.mxu0 %v526
    %748 = vmatpush1.bf16.msra.mxu0 %v525
    %749 = vmatprep.subr.bf16.mxu0 %v524
    %750 = vmatpush1.bf16.msra.mxu0 %v523
    %751 = vmatprep.subr.bf16.mxu0 %v522
    %752 = vmatpush1.bf16.msra.mxu0 %v521
    %753 = vmatprep.subr.bf16.mxu0 %v520
    %754 = vmatpush1.bf16.msra.mxu0 %v519
    %755 = vmatprep.subr.bf16.mxu0 %v518
    %756 = vmatpush1.bf16.msra.mxu0 %v517
    %757 = vmatprep.subr.bf16.mxu0 %v548
    %758 = vmatpush2.bf16.msra.mxu0 %v547
    %759 = vmatprep.subr.bf16.mxu0 %v546
    %760 = vmatpush2.bf16.msra.mxu0 %v545
    %761 = vmatprep.subr.bf16.mxu0 %v544
    %762 = vmatpush2.bf16.msra.mxu0 %v543
    %763 = vmatprep.subr.bf16.mxu0 %v542
    %764 = vmatpush2.bf16.msra.mxu0 %v541
    %765 = vmatprep.subr.bf16.mxu0 %v540
    %766 = vmatpush2.bf16.msra.mxu0 %v539
    %767 = vmatprep.subr.bf16.mxu0 %v538
    %768 = vmatpush2.bf16.msra.mxu0 %v537
    %769 = vmatprep.subr.bf16.mxu0 %v536
    %770 = vmatpush2.bf16.msra.mxu0 %v535
    %771 = vmatprep.subr.bf16.mxu0 %v534
    %772 = vmatpush2.bf16.msra.mxu0 %v533
    %773 = vmatprep.mubr.bf16.mxu0 %v168
    %774 = vmatmul.mubr.bf16.gmra.mxu0 %v167
    %v775 = vpop.f32.mrf.mxu0
    %v776 = vadd.f32 %v149, %v775
    %v777 = vpop.f32.mrf.mxu0
    %v778 = vadd.f32 %v153, %v777
    %v779 = vpop.f32.mrf.mxu0
    %v780 = vpop.f32.mrf.mxu0
    %781 = vdwg.mxu0
    %782 = vmatprep.subr.bf16.mxu0 %v564
    %783 = vmatpush1.bf16.msra.mxu0 %v563
    %784 = vmatprep.subr.bf16.mxu0 %v562
    %785 = vmatpush1.bf16.msra.mxu0 %v561
    %786 = vmatprep.subr.bf16.mxu0 %v560
    %787 = vmatpush1.bf16.msra.mxu0 %v559
    %788 = vmatprep.subr.bf16.mxu0 %v558
    %789 = vmatpush1.bf16.msra.mxu0 %v557
    %790 = vmatprep.subr.bf16.mxu0 %v556
    %791 = vmatpush1.bf16.msra.mxu0 %v555
    %792 = vmatprep.subr.bf16.mxu0 %v554
    %793 = vmatpush1.bf16.msra.mxu0 %v553
    %794 = vmatprep.subr.bf16.mxu0 %v552
    %795 = vmatpush1.bf16.msra.mxu0 %v551
    %796 = vmatprep.subr.bf16.mxu0 %v550
    %797 = vmatpush1.bf16.msra.mxu0 %v549
    %798 = vmatprep.subr.bf16.mxu0 %v580
    %799 = vmatpush2.bf16.msra.mxu0 %v579
    %800 = vmatprep.subr.bf16.mxu0 %v578
    %801 = vmatpush2.bf16.msra.mxu0 %v577
    %802 = vmatprep.subr.bf16.mxu0 %v576
    %803 = vmatpush2.bf16.msra.mxu0 %v575
    %804 = vmatprep.subr.bf16.mxu0 %v574
    %805 = vmatpush2.bf16.msra.mxu0 %v573
    %806 = vmatprep.subr.bf16.mxu0 %v572
    %807 = vmatpush2.bf16.msra.mxu0 %v571
    %808 = vmatprep.subr.bf16.mxu0 %v570
    %809 = vmatpush2.bf16.msra.mxu0 %v569
    %810 = vmatprep.subr.bf16.mxu0 %v568
    %811 = vmatpush2.bf16.msra.mxu0 %v567
    %812 = vmatprep.subr.bf16.mxu0 %v566
    %813 = vmatpush2.bf16.msra.mxu0 %v565
    %814 = vmatprep.mubr.bf16.mxu0 %v170
    %815 = vmatmul.mubr.bf16.gmra.mxu0 %v169
    %v816 = vpop.f32.mrf.mxu0
    %v817 = vadd.f32 %v776, %v816
    %v818 = vpop.f32.mrf.mxu0
    %v819 = vadd.f32 %v778, %v818
    %v820 = vpop.f32.mrf.mxu0
    %v821 = vpop.f32.mrf.mxu0
    %822 = vdwg.mxu0
    %823 = vmatprep.subr.bf16.mxu0 %v596
    %824 = vmatpush1.bf16.msra.mxu0 %v595
    %825 = vmatprep.subr.bf16.mxu0 %v594
    %826 = vmatpush1.bf16.msra.mxu0 %v593
    %827 = vmatprep.subr.bf16.mxu0 %v592
    %828 = vmatpush1.bf16.msra.mxu0 %v591
    %829 = vmatprep.subr.bf16.mxu0 %v590
    %830 = vmatpush1.bf16.msra.mxu0 %v589
    %831 = vmatprep.subr.bf16.mxu0 %v588
    %832 = vmatpush1.bf16.msra.mxu0 %v587
    %833 = vmatprep.subr.bf16.mxu0 %v586
    %834 = vmatpush1.bf16.msra.mxu0 %v585
    %835 = vmatprep.subr.bf16.mxu0 %v584
    %836 = vmatpush1.bf16.msra.mxu0 %v583
    %837 = vmatprep.subr.bf16.mxu0 %v582
    %838 = vmatpush1.bf16.msra.mxu0 %v581
    %839 = vmatprep.subr.bf16.mxu0 %v612
    %840 = vmatpush2.bf16.msra.mxu0 %v611
    %841 = vmatprep.subr.bf16.mxu0 %v610
    %842 = vmatpush2.bf16.msra.mxu0 %v609
    %843 = vmatprep.subr.bf16.mxu0 %v608
    %844 = vmatpush2.bf16.msra.mxu0 %v607
    %845 = vmatprep.subr.bf16.mxu0 %v606
    %846 = vmatpush2.bf16.msra.mxu0 %v605
    %847 = vmatprep.subr.bf16.mxu0 %v604
    %848 = vmatpush2.bf16.msra.mxu0 %v603
    %849 = vmatprep.subr.bf16.mxu0 %v602
    %850 = vmatpush2.bf16.msra.mxu0 %v601
    %851 = vmatprep.subr.bf16.mxu0 %v600
    %852 = vmatpush2.bf16.msra.mxu0 %v599
    %853 = vmatprep.subr.bf16.mxu0 %v598
    %854 = vmatpush2.bf16.msra.mxu0 %v597
    %855 = vmatprep.mubr.bf16.mxu0 %v172
    %856 = vmatmul.mubr.bf16.gmra.mxu0 %v171
    %v857 = vpop.f32.mrf.mxu0
    %v858 = vadd.f32 %v817, %v857
    %v859 = vpop.f32.mrf.mxu0
    %v860 = vadd.f32 %v819, %v859
    %v861 = vpop.f32.mrf.mxu0
    %v862 = vpop.f32.mrf.mxu0
    %863 = vdwg.mxu0
    %864 = vmatprep.subr.bf16.mxu0 %v628
    %865 = vmatpush1.bf16.msra.mxu0 %v627
    %866 = vmatprep.subr.bf16.mxu0 %v626
    %867 = vmatpush1.bf16.msra.mxu0 %v625
    %868 = vmatprep.subr.bf16.mxu0 %v624
    %869 = vmatpush1.bf16.msra.mxu0 %v623
    %870 = vmatprep.subr.bf16.mxu0 %v622
    %871 = vmatpush1.bf16.msra.mxu0 %v621
    %872 = vmatprep.subr.bf16.mxu0 %v620
    %873 = vmatpush1.bf16.msra.mxu0 %v619
    %874 = vmatprep.subr.bf16.mxu0 %v618
    %875 = vmatpush1.bf16.msra.mxu0 %v617
    %876 = vmatprep.subr.bf16.mxu0 %v616
    %877 = vmatpush1.bf16.msra.mxu0 %v615
    %878 = vmatprep.subr.bf16.mxu0 %v614
    %879 = vmatpush1.bf16.msra.mxu0 %v613
    %880 = vmatprep.subr.bf16.mxu0 0
    %881 = vmatpush2.bf16.msra.mxu0 0
    %882 = vmatprep.subr.bf16.mxu0 0
    %883 = vmatpush2.bf16.msra.mxu0 0
    %884 = vmatprep.subr.bf16.mxu0 0
    %885 = vmatpush2.bf16.msra.mxu0 0
    %886 = vmatprep.subr.bf16.mxu0 0
    %887 = vmatpush2.bf16.msra.mxu0 0
    %888 = vmatprep.subr.bf16.mxu0 0
    %889 = vmatpush2.bf16.msra.mxu0 0
    %890 = vmatprep.subr.bf16.mxu0 0
    %891 = vmatpush2.bf16.msra.mxu0 0
    %892 = vmatprep.subr.bf16.mxu0 0
    %893 = vmatpush2.bf16.msra.mxu0 0
    %894 = vmatprep.subr.bf16.mxu0 0
    %895 = vmatpush2.bf16.msra.mxu0 0
    %896 = vmatprep.mubr.bf16.mxu0 0
    %897 = vmatmul.mubr.bf16.gmra.mxu0 %v173
    %v898 = vpop.f32.mrf.mxu0
    %v899 = vadd.f32 %v858, %v898
    %v900 = vpop.f32.mrf.mxu0
    %v901 = vadd.f32 %v860, %v900
    %v902 = vpop.f32.mrf.mxu0
    %v903 = vpop.f32.mrf.mxu0
    %904 = vdwg.mxu0
    %v905 = vmax.f32 %v899, 0.0
    %v906 = vmax.f32 %v901, 0.0
    %v907 = vpack.c.bf16 %v905, %v905
    %v908 = vpack.c.bf16 %v906, %v906
    %v909 = vld [vmem:[%s3] sm:$0xf]
    %v910 = vld [vmem:[%s3 + $0x4] sm:$0xf]
    %v911 = vld [vmem:[%s3 + $0x8] sm:$0xf]
    %v912 = vld [vmem:[%s3 + $0xc] sm:$0xf]
    %v913 = vld [vmem:[%s3 + $0x10] sm:$0xf]
    %v914 = vld [vmem:[%s3 + $0x14] sm:$0xf]
    %v915 = vld [vmem:[%s3 + $0x18] sm:$0xf]
    %v916 = vld [vmem:[%s3 + $0x1c] sm:$0xf]
    %v917 = vld [vmem:[%s3 + $0x20] sm:$0xf]
    %v918 = vld [vmem:[%s3 + $0x24] sm:$0xf]
    %v919 = vld [vmem:[%s3 + $0x28] sm:$0xf]
    %v920 = vld [vmem:[%s3 + $0x2c] sm:$0xf]
    %v921 = vld [vmem:[%s3 + $0x30] sm:$0xf]
    %v922 = vld [vmem:[%s3 + $0x34] sm:$0xf]
    %v923 = vld [vmem:[%s3 + $0x38] sm:$0xf]
    %v924 = vld [vmem:[%s3 + $0x3c] sm:$0xf]
    %v925 = vld [vmem:[%s3 + $0x40] sm:$0xf]
    %v926 = vld [vmem:[%s3 + $0x44] sm:$0xf]
    %v927 = vld [vmem:[%s3 + $0x48] sm:$0xf]
    %v928 = vld [vmem:[%s3 + $0x4c] sm:$0xf]
    %v929 = vld [vmem:[%s3 + $0x50] sm:$0xf]
    %v930 = vld [vmem:[%s3 + $0x54] sm:$0xf]
    %v931 = vld [vmem:[%s3 + $0x58] sm:$0xf]
    %v932 = vld [vmem:[%s3 + $0x5c] sm:$0xf]
    %v933 = vld [vmem:[%s3 + $0x60] sm:$0xf]
    %v934 = vld [vmem:[%s3 + $0x64] sm:$0xf]
    %v935 = vld [vmem:[%s3 + $0x68] sm:$0xf]
    %v936 = vld [vmem:[%s3 + $0x6c] sm:$0xf]
    %v937 = vld [vmem:[%s3 + $0x70] sm:$0xf]
    %v938 = vld [vmem:[%s3 + $0x74] sm:$0xf]
    %v939 = vld [vmem:[%s3 + $0x78] sm:$0xf]
    %v940 = vld [vmem:[%s3 + $0x7c] sm:$0xf]
    %v941 = vld [vmem:[%s4] sm:$0x1]
    %v943 = vlaneseq
    %v944 = vshrl.u32 %v943, 7
    %v945 = vsub.s32 0, %v944
    %v946 = vrot.slane %v941, %v945
    %v980 = vunpack.c.l.b16 %v909
    %v981 = vunpack.c.l.b16 %v910
    %v982 = vunpack.c.l.b16 %v911
    %v983 = vunpack.c.l.b16 %v912
    %v984 = vunpack.c.l.b16 %v913
    %v985 = vunpack.c.l.b16 %v914
    %v986 = vunpack.c.l.b16 %v915
    %v987 = vunpack.c.l.b16 %v916
    %v988 = vunpack.c.l.b16 %v917
    %v989 = vunpack.c.l.b16 %v918
    %v990 = vunpack.c.l.b16 %v919
    %v991 = vunpack.c.l.b16 %v920
    %v992 = vunpack.c.l.b16 %v921
    %v993 = vunpack.c.l.b16 %v922
    %v994 = vunpack.c.l.b16 %v923
    %v995 = vunpack.c.l.b16 %v924
    %v996 = vunpack.c.l.b16 %v925
    %v997 = vunpack.c.l.b16 %v926
    %v998 = vunpack.c.l.b16 %v927
    %v999 = vunpack.c.l.b16 %v928
    %v1000 = vunpack.c.l.b16 %v929
    %v1001 = vunpack.c.l.b16 %v930
    %v1002 = vunpack.c.l.b16 %v931
    %v1003 = vunpack.c.l.b16 %v932
    %v1004 = vunpack.c.l.b16 %v933
    %v1005 = vunpack.c.l.b16 %v934
    %v1006 = vunpack.c.l.b16 %v935
    %v1007 = vunpack.c.l.b16 %v936
    %v1008 = vunpack.c.l.b16 %v937
    %v1009 = vunpack.c.l.b16 %v938
    %v1010 = vunpack.c.l.b16 %v939
    %v1011 = vunpack.c.l.b16 %v940
    %v1012 = vpack.c.b16 %v981, %v980
    %v1013 = vpack.c.b16 %v983, %v982
    %v1014 = vpack.c.b16 %v985, %v984
    %v1015 = vpack.c.b16 %v987, %v986
    %v1016 = vpack.c.b16 %v989, %v988
    %v1017 = vpack.c.b16 %v991, %v990
    %v1018 = vpack.c.b16 %v993, %v992
    %v1019 = vpack.c.b16 %v995, %v994
    %v1020 = vpack.c.b16 %v997, %v996
    %v1021 = vpack.c.b16 %v999, %v998
    %v1022 = vpack.c.b16 %v1001, %v1000
    %v1023 = vpack.c.b16 %v1003, %v1002
    %v1024 = vpack.c.b16 %v1005, %v1004
    %v1025 = vpack.c.b16 %v1007, %v1006
    %v1026 = vpack.c.b16 %v1009, %v1008
    %v1027 = vpack.c.b16 %v1011, %v1010
    %1044 = vmatprep.subr.bf16.mxu0 0
    %1045 = vmatpush1.bf16.msra.mxu0 %v1019
    %1046 = vmatprep.subr.bf16.mxu0 0
    %1047 = vmatpush1.bf16.msra.mxu0 %v1018
    %1048 = vmatprep.subr.bf16.mxu0 0
    %1049 = vmatpush1.bf16.msra.mxu0 %v1017
    %1050 = vmatprep.subr.bf16.mxu0 0
    %1051 = vmatpush1.bf16.msra.mxu0 %v1016
    %1052 = vmatprep.subr.bf16.mxu0 0
    %1053 = vmatpush1.bf16.msra.mxu0 %v1015
    %1054 = vmatprep.subr.bf16.mxu0 0
    %1055 = vmatpush1.bf16.msra.mxu0 %v1014
    %1056 = vmatprep.subr.bf16.mxu0 0
    %1057 = vmatpush1.bf16.msra.mxu0 %v1013
    %1058 = vmatprep.subr.bf16.mxu0 0
    %1059 = vmatpush1.bf16.msra.mxu0 %v1012
    %1060 = vmatprep.subr.bf16.mxu0 0
    %1061 = vmatpush2.bf16.msra.mxu0 %v1027
    %1062 = vmatprep.subr.bf16.mxu0 0
    %1063 = vmatpush2.bf16.msra.mxu0 %v1026
    %1064 = vmatprep.subr.bf16.mxu0 0
    %1065 = vmatpush2.bf16.msra.mxu0 %v1025
    %1066 = vmatprep.subr.bf16.mxu0 0
    %1067 = vmatpush2.bf16.msra.mxu0 %v1024
    %1068 = vmatprep.subr.bf16.mxu0 0
    %1069 = vmatpush2.bf16.msra.mxu0 %v1023
    %1070 = vmatprep.subr.bf16.mxu0 0
    %1071 = vmatpush2.bf16.msra.mxu0 %v1022
    %1072 = vmatprep.subr.bf16.mxu0 0
    %1073 = vmatpush2.bf16.msra.mxu0 %v1021
    %1074 = vmatprep.subr.bf16.mxu0 0
    %1075 = vmatpush2.bf16.msra.mxu0 %v1020
    %1076 = vmatprep.mubr.bf16.mxu0 %v908
    %1077 = vmatmul.mubr.bf16.gmra.mxu0 %v907
    %v1078 = vpop.f32.mrf.mxu0
    %v1079 = vadd.f32 %v946, %v1078
    %v1080 = vpop.f32.mrf.mxu0
    %v1081 = vpop.f32.mrf.mxu0
    %v1082 = vpop.f32.mrf.mxu0
    %1083 = vdwg.mxu0
    %v1084 = vmax.f32 %v1079, 0.0
    %v1085 = vpack.c.bf16 %v1084, %v1084
    %v1086 = vld [vmem:[%s5] sm:$0xf]
    %v1087 = vld [vmem:[%s5 + $0x4] sm:$0xf]
    %v1088 = vld [vmem:[%s5 + $0x8] sm:$0xf]
    %v1089 = vld [vmem:[%s5 + $0xc] sm:$0xf]
    %v1090 = vld [vmem:[%s5 + $0x10] sm:$0xf]
    %v1091 = vld [vmem:[%s5 + $0x14] sm:$0xf]
    %v1092 = vld [vmem:[%s5 + $0x18] sm:$0xf]
    %v1093 = vld [vmem:[%s5 + $0x1c] sm:$0xf]
    %v1094 = vld [vmem:[%s5 + $0x20] sm:$0xf]
    %v1095 = vld [vmem:[%s5 + $0x24] sm:$0xf]
    %v1096 = vld [vmem:[%s5 + $0x28] sm:$0xf]
    %v1097 = vld [vmem:[%s5 + $0x2c] sm:$0xf]
    %v1098 = vld [vmem:[%s5 + $0x30] sm:$0xf]
    %v1099 = vld [vmem:[%s5 + $0x34] sm:$0xf]
    %v1100 = vld [vmem:[%s5 + $0x38] sm:$0xf]
    %v1101 = vld [vmem:[%s5 + $0x3c] sm:$0xf]
    %v1102 = vld [vmem:[%s6] sm:$0x1]
    %v1104 = vlaneseq
    %v1105 = vshrl.u32 %v1104, 7
    %v1106 = vsub.s32 0, %v1105
    %v1107 = vrot.slane %v1102, %v1106
    %v1125 = vunpack.c.l.b16 %v1086
    %v1126 = vunpack.c.l.b16 %v1087
    %v1127 = vunpack.c.l.b16 %v1088
    %v1128 = vunpack.c.l.b16 %v1089
    %v1129 = vunpack.c.l.b16 %v1090
    %v1130 = vunpack.c.l.b16 %v1091
    %v1131 = vunpack.c.l.b16 %v1092
    %v1132 = vunpack.c.l.b16 %v1093
    %v1133 = vunpack.c.l.b16 %v1094
    %v1134 = vunpack.c.l.b16 %v1095
    %v1135 = vunpack.c.l.b16 %v1096
    %v1136 = vunpack.c.l.b16 %v1097
    %v1137 = vunpack.c.l.b16 %v1098
    %v1138 = vunpack.c.l.b16 %v1099
    %v1139 = vunpack.c.l.b16 %v1100
    %v1140 = vunpack.c.l.b16 %v1101
    %v1141 = vpack.c.b16 %v1126, %v1125
    %v1142 = vpack.c.b16 %v1128, %v1127
    %v1143 = vpack.c.b16 %v1130, %v1129
    %v1144 = vpack.c.b16 %v1132, %v1131
    %v1145 = vpack.c.b16 %v1134, %v1133
    %v1146 = vpack.c.b16 %v1136, %v1135
    %v1147 = vpack.c.b16 %v1138, %v1137
    %v1148 = vpack.c.b16 %v1140, %v1139
    %1157 = vmatprep.subr.bf16.mxu0 0
    %1158 = vmatpush1.bf16.msra.mxu0 %v1148
    %1159 = vmatprep.subr.bf16.mxu0 0
    %1160 = vmatpush1.bf16.msra.mxu0 %v1147
    %1161 = vmatprep.subr.bf16.mxu0 0
    %1162 = vmatpush1.bf16.msra.mxu0 %v1146
    %1163 = vmatprep.subr.bf16.mxu0 0
    %1164 = vmatpush1.bf16.msra.mxu0 %v1145
    %1165 = vmatprep.subr.bf16.mxu0 0
    %1166 = vmatpush1.bf16.msra.mxu0 %v1144
    %1167 = vmatprep.subr.bf16.mxu0 0
    %1168 = vmatpush1.bf16.msra.mxu0 %v1143
    %1169 = vmatprep.subr.bf16.mxu0 0
    %1170 = vmatpush1.bf16.msra.mxu0 %v1142
    %1171 = vmatprep.subr.bf16.mxu0 0
    %1172 = vmatpush1.bf16.msra.mxu0 %v1141
    %1173 = vmatprep.subr.bf16.mxu0 0
    %1174 = vmatpush2.bf16.msra.mxu0 0
    %1175 = vmatprep.subr.bf16.mxu0 0
    %1176 = vmatpush2.bf16.msra.mxu0 0
    %1177 = vmatprep.subr.bf16.mxu0 0
    %1178 = vmatpush2.bf16.msra.mxu0 0
    %1179 = vmatprep.subr.bf16.mxu0 0
    %1180 = vmatpush2.bf16.msra.mxu0 0
    %1181 = vmatprep.subr.bf16.mxu0 0
    %1182 = vmatpush2.bf16.msra.mxu0 0
    %1183 = vmatprep.subr.bf16.mxu0 0
    %1184 = vmatpush2.bf16.msra.mxu0 0
    %1185 = vmatprep.subr.bf16.mxu0 0
    %1186 = vmatpush2.bf16.msra.mxu0 0
    %1187 = vmatprep.subr.bf16.mxu0 0
    %1188 = vmatpush2.bf16.msra.mxu0 0
    %1189 = vmatprep.mubr.bf16.mxu0 0
    %1190 = vmatmul.mubr.bf16.gmra.mxu0 %v1085
    %v1191 = vpop.f32.mrf.mxu0
    %v1192 = vadd.f32 %v1107, %v1191
    %v1193 = vpop.f32.mrf.mxu0
    %v1194 = vpop.f32.mrf.mxu0
    %v1195 = vpop.f32.mrf.mxu0
    %1196 = vdwg.mxu0
    %1197 = vst [vmem:[#allocation2] sm:$0xff] %v1192
    // Predicated region
    $region30: #{_classifier_forward.1} parent=1 // pred_check
      _
    $region31: #{_classifier_forward.1} parent=1 // pred_check_branch
      %1199 = sbr.rel (0) target = $region33
    $region32: #{_classifier_forward.1} parent=1 // pred_region
      %s1201 = ssub.s32 128, 128
      %1202 = vsyncadd [#allocation3], %s1201
      %s1204 = sshll.u32 [#allocation2], 4
      %s1205 = int_to_ptr.vmem [resolvable:$true] %s1204
      %1207 = dma.vmem_to_hbm [thread:$0]  %s1205, 128, %s7, [#allocation3]
    $region33: #{_classifier_forward.1} parent=1 // pred_fallthru
      _
    // Predicated region
    $region34: #{_classifier_forward.1} parent=1 // pred_check
      _
    $region35: #{_classifier_forward.1} parent=1 // pred_check_branch
      %1209 = sbr.rel (0) target = $region37
    $region36: #{_classifier_forward.1} parent=1 // pred_region
      %1210 = dma.done [#allocation3], 128
    $region37: #{_classifier_forward.1} parent=1 // pred_fallthru
      _
    %1211 = vsyncpa [#allocation3], 1

</llo_original>
